<compile_context>
chip_gen: v7x
topology: tpu7x:2x2x1
jax: 0.10.0
libtpu: 0.0.40
codegen_flags: <defaults>
</compile_context>

<pallas_src>
import jax
import jax.numpy as jnp
from jax.experimental import pallas as pl
from jax.experimental.pallas import tpu as pltpu

D_IN = 784
D_HID = 256
NEG_SLOPE = 0.4


def _round_up(x, m):
    return ((x + m - 1) // m) * m


def _choose_block_b(B):
    if B < 256:
        # Single grid step; only (8, *) sublane alignment needed.
        return _round_up(max(B, 1), 8)
    # >= 2 grid steps so the 'parallel' batch axis can shard across both
    # TensorCores on v7x; cap at 2048 so 2x double-buffered x tiles (bf16:
    # ~6.4 MB, f32: ~12.8 MB) + resident weights stay well inside the 32 MiB
    # scoped-VMEM default on every chip (incl. v7x's 64 MiB physical VMEM).
    n_steps = max(2, pl.cdiv(B, 2048))
    return min(2048, _round_up(pl.cdiv(B, n_steps), 128))


def discriminator_kernel(x_ref, w1_ref, b1_ref, w2_ref, b2_ref, o_ref):
    # First Linear: (block_b, 784) @ (784, 256) on the MXU at native bf16 rate,
    # f32 accumulation.  If x arrives as bf16 the astype is a no-op (and the DMA
    # was half-width); if f32, the VPU cast is fully hidden under the matmul.
    xb = x_ref[...].astype(jnp.bfloat16)
    h = jnp.dot(xb, w1_ref[...], preferred_element_type=jnp.float32)
    h = h + b1_ref[...]                          # (1, 256) f32 broadcast
    # LeakyReLU(0.4): one VPU max (valid because 0 < slope < 1).
    h = jnp.maximum(h, NEG_SLOPE * h)
    # Second Linear (out_features == 1): an MXU matmul with a single output
    # column wastes >99% of the MXU, so do VPU multiply + reduction.  Fold the
    # two 128-lane halves with a VPU add first so only one 128-lane XLU reduce
    # per row group lands in the extended slot shared with vmatmul pushes.
    hw = h * w2_ref[...]                         # (block_b, 256)  VPU
    hw = hw[:, : D_HID // 2] + hw[:, D_HID // 2 :]  # (block_b, 128)  VPU
    z = jnp.sum(hw, axis=-1)                     # (block_b,)      XLU
    z = (z + b2_ref[0]).reshape(1, -1)           # (1, block_b): lane-dense
    o_ref[...] = jax.nn.sigmoid(z)               # exp -> EUP


def discriminator_forward(x, w1, b1, w2, b2, *, block_b=None):
    """x: (B, 784) float32 or bfloat16 -> (B, 1) float32.

    Passing x as bfloat16 halves the dominant HBM stream; the matmul accumulates
    in f32 either way.
    """
    B, d_in = x.shape
    assert d_in == D_IN and w1.shape == (D_IN, D_HID)
    assert b1.shape == (1, D_HID) and w2.shape == (1, D_HID) and b2.shape == (1,)

    # Resident first-layer weight streamed as bf16 (one-time tiny cast, ~200 KB).
    w1 = w1.astype(jnp.bfloat16)
    b1 = b1.astype(jnp.float32)
    w2 = w2.astype(jnp.float32)
    b2 = b2.astype(jnp.float32)

    if block_b is None:
        block_b = _choose_block_b(B)
    else:
        block_b = _round_up(block_b, 8)
    if _round_up(B, block_b) > block_b:
        # Multi-step grid: lane-dense (1, block_b) output blocks need a
        # 128-aligned lane width; round up internally instead of asserting.
        block_b = _round_up(block_b, 128)

    b_pad = _round_up(B, block_b)
    if b_pad != B:
        x = jnp.pad(x, ((0, b_pad - B), (0, 0)))  # zero rows; sliced off below

    grid = (b_pad // block_b,)
    flops = 2 * b_pad * D_IN * D_HID + 5 * b_pad * D_HID
    bytes_accessed = (
        b_pad * D_IN * x.dtype.itemsize          # x stream (bf16 or f32)
        + D_IN * D_HID * 2                       # W1 bf16
        + (2 * D_HID + 1) * 4                    # b1, w2, b2
        + b_pad * 4                              # output
    )

    out = pl.pallas_call(
        discriminator_kernel,
        out_shape=jax.ShapeDtypeStruct((1, b_pad), jnp.float32),
        grid=grid,
        in_specs=[
            pl.BlockSpec((block_b, D_IN), lambda i: (i, 0)),    # x: batch-tiled
            pl.BlockSpec((D_IN, D_HID), lambda i: (0, 0)),      # W1 (bf16): resident
            pl.BlockSpec((1, D_HID), lambda i: (0, 0)),         # b1: resident
            pl.BlockSpec((1, D_HID), lambda i: (0, 0)),         # w2 row: resident
            pl.BlockSpec(memory_space=pltpu.MemorySpace.SMEM),  # b2: SMEM scalar
        ],
        out_specs=pl.BlockSpec((1, block_b), lambda i: (0, i)),
        compiler_params=pltpu.CompilerParams(
            dimension_semantics=("parallel",),
        ),
        cost_estimate=pl.CostEstimate(
            flops=flops, transcendentals=b_pad, bytes_accessed=bytes_accessed),
    )(x, w1, b1, w2, b2)

    return out.reshape(-1)[:B].reshape(B, 1)


def init_params(key):
    """Deterministic init mimicking PyTorch Linear default (U(+-1/sqrt(fan_in)))."""
    k1, k2, k3, k4 = jax.random.split(key, 4)
    bound1 = 1.0 / jnp.sqrt(784.0)
    bound2 = 1.0 / jnp.sqrt(256.0)
    w1 = jax.random.uniform(k1, (D_IN, D_HID), jnp.float32, -bound1, bound1)
    b1 = jax.random.uniform(k2, (1, D_HID), jnp.float32, -bound1, bound1)
    w2 = jax.random.uniform(k3, (1, D_HID), jnp.float32, -bound2, bound2)
    b2 = jax.random.uniform(k4, (1,), jnp.float32, -bound2, bound2)
    return w1, b1, w2, b2


def reference_forward(x, w1, b1, w2, b2):
    h = x @ w1 + b1
    h = jnp.where(h > 0, h, NEG_SLOPE * h)
    z = h @ w2.T + b2
    return jax.nn.sigmoid(z)


if __name__ == "__main__":
    key = jax.random.PRNGKey(0)
    kx, kp = jax.random.split(key)
    w1, b1, w2, b2 = init_params(kp)

    # 1) Small batch, single grid step (B rounded up to a multiple of 8 internally).
    x_small = jax.random.normal(kx, (4, D_IN), jnp.float32)
    out_small = jax.block_until_ready(discriminator_forward(x_small, w1, b1, w2, b2))
    ref_small = reference_forward(x_small, w1, b1, w2, b2)
    assert out_small.shape == (4, 1), out_small.shape
    assert jnp.allclose(out_small, ref_small, atol=1e-2, rtol=1e-2), "small-batch mismatch"

    # 2) Ragged batch, multi-step pipelined grid (300 -> block_b=256, padded 512,
    #    grid=2), with x stored in bf16 to exercise the halved-HBM-traffic path.
    x_big = jax.random.normal(kx, (300, D_IN), jnp.float32)
    x_big_bf16 = x_big.astype(jnp.bfloat16)
    out_big = jax.block_until_ready(discriminator_forward(x_big_bf16, w1, b1, w2, b2))
    ref_big = reference_forward(x_big_bf16.astype(jnp.float32), w1, b1, w2, b2)
    assert out_big.shape == (300, 1), out_big.shape
    assert jnp.allclose(out_big, ref_big, atol=1e-2, rtol=1e-2), "big-batch mismatch"

    print("KERNEL_OK")
</pallas_src>

<mosaic_0001>
module attributes {stable_mosaic.version = 11 : i64} {
  func.func @discriminator_kernel(%arg0: i32, %arg1: memref<8x784xf32, #tpu.memory_space<vmem>>, %arg2: memref<784x256xbf16, #tpu.memory_space<vmem>>, %arg3: memref<1x256xf32, #tpu.memory_space<vmem>>, %arg4: memref<1x256xf32, #tpu.memory_space<vmem>>, %arg5: memref<1xf32, #tpu.memory_space<smem>>, %arg6: memref<1x8xf32, #tpu.memory_space<vmem>>) attributes {dimension_semantics = [#tpu.dimension_semantics<parallel>], iteration_bounds = array<i64: 1>, scalar_prefetch = 0 : i64, scratch_operands = 0 : i64, tpu.core_type = #tpu.core_type<tc>, window_params = [{transform_indices = @transform_0, window_bounds = array<i64: 8, 784>}, {pipeline_mode = #tpu.pipeline_mode<synchronous>, transform_indices = @transform_1, window_bounds = array<i64: 784, 256>}, {pipeline_mode = #tpu.pipeline_mode<synchronous>, transform_indices = @transform_2, window_bounds = array<i64: 1, 256>}, {pipeline_mode = #tpu.pipeline_mode<synchronous>, transform_indices = @transform_3, window_bounds = array<i64: 1, 256>}, {transform_indices = @transform_4, window_bounds = array<i64: 1>}, {transform_indices = @transform_5, window_bounds = array<i64: 1, 8>}]} {
    %c0 = arith.constant 0 : index
    %c0_0 = arith.constant 0 : index
    %0 = vector.load %arg1[%c0, %c0_0] : memref<8x784xf32, #tpu.memory_space<vmem>>, vector<8x784xf32>
    %1 = arith.truncf %0 : vector<8x784xf32> to vector<8x784xbf16>
    %c0_1 = arith.constant 0 : index
    %c0_2 = arith.constant 0 : index
    %2 = vector.load %arg2[%c0_1, %c0_2] : memref<784x256xbf16, #tpu.memory_space<vmem>>, vector<784x256xbf16>
    %cst = arith.constant dense<0.000000e+00> : vector<8x256xf32>
    %3 = tpu.matmul %1, %2, %cst {dimension_numbers = #tpu.dot_dimension_numbers<[1], [0], [0], [1], [0, 0, 1, 1], [], []>} : vector<8x784xbf16>, vector<784x256xbf16>, vector<8x256xf32> -> vector<8x256xf32>
    %c0_3 = arith.constant 0 : index
    %c0_4 = arith.constant 0 : index
    %4 = vector.load %arg3[%c0_3, %c0_4] : memref<1x256xf32, #tpu.memory_space<vmem>>, vector<1x256xf32>
    %5 = vector.broadcast %4 : vector<1x256xf32> to vector<8x256xf32>
    %6 = arith.addf %3, %5 : vector<8x256xf32>
    %cst_5 = arith.constant 4.000000e-01 : f32
    %7 = vector.broadcast %cst_5 : f32 to vector<8x256xf32>
    %8 = arith.mulf %7, %6 : vector<8x256xf32>
    %9 = arith.maximumf %6, %8 : vector<8x256xf32>
    %c0_6 = arith.constant 0 : index
    %c0_7 = arith.constant 0 : index
    %10 = vector.load %arg4[%c0_6, %c0_7] : memref<1x256xf32, #tpu.memory_space<vmem>>, vector<1x256xf32>
    %11 = vector.broadcast %10 : vector<1x256xf32> to vector<8x256xf32>
    %12 = arith.mulf %9, %11 : vector<8x256xf32>
    %13 = vector.extract_strided_slice %12 {offsets = [0, 0], sizes = [8, 128], strides = [1, 1]} : vector<8x256xf32> to vector<8x128xf32>
    %14 = vector.extract_strided_slice %12 {offsets = [0, 128], sizes = [8, 128], strides = [1, 1]} : vector<8x256xf32> to vector<8x128xf32>
    %15 = arith.addf %13, %14 : vector<8x128xf32>
    %cst_8 = arith.constant dense<0.000000e+00> : vector<8xf32>
    %16 = vector.multi_reduction <add>, %15, %cst_8 [1] : vector<8x128xf32> to vector<8xf32>
    %c0_9 = arith.constant 0 : index
    %17 = memref.load %arg5[%c0_9] : memref<1xf32, #tpu.memory_space<smem>>
    %18 = vector.broadcast %17 : f32 to vector<8xf32>
    %19 = arith.addf %16, %18 : vector<8xf32>
    %20 = vector.shape_cast %19 : vector<8xf32> to vector<1x8xf32>
    %21 = arith.negf %20 : vector<1x8xf32>
    %22 = math.exp %21 : vector<1x8xf32>
    %cst_10 = arith.constant 1.000000e+00 : f32
    %23 = vector.broadcast %cst_10 : f32 to vector<1x8xf32>
    %24 = arith.addf %23, %22 : vector<1x8xf32>
    %25 = arith.divf %23, %24 : vector<1x8xf32>
    %c0_11 = arith.constant 0 : index
    %c0_12 = arith.constant 0 : index
    %26 = vector.load %arg6[%c0_11, %c0_12] : memref<1x8xf32, #tpu.memory_space<vmem>>, vector<1x8xf32>
    tpu.vector_store %arg6[%c0_11, %c0_12], %25 {strides = array<i32>} : memref<1x8xf32, #tpu.memory_space<vmem>>, vector<1x8xf32>,
    return
  }
  func.func @transform_0(%arg0: i32) -> (i32, i32) {
    %c0_i32 = arith.constant 0 : i32
    %c0_i32_0 = arith.constant 0 : i32
    return %arg0, %c0_i32 : i32, i32
  }
  func.func @transform_1(%arg0: i32) -> (i32, i32) {
    %c0_i32 = arith.constant 0 : i32
    %c0_i32_0 = arith.constant 0 : i32
    %c0_i32_1 = arith.constant 0 : i32
    return %c0_i32, %c0_i32_0 : i32, i32
  }
  func.func @transform_2(%arg0: i32) -> (i32, i32) {
    %c0_i32 = arith.constant 0 : i32
    %c0_i32_0 = arith.constant 0 : i32
    %c0_i32_1 = arith.constant 0 : i32
    return %c0_i32, %c0_i32_0 : i32, i32
  }
  func.func @transform_3(%arg0: i32) -> (i32, i32) {
    %c0_i32 = arith.constant 0 : i32
    %c0_i32_0 = arith.constant 0 : i32
    %c0_i32_1 = arith.constant 0 : i32
    return %c0_i32, %c0_i32_0 : i32, i32
  }
  func.func @transform_4(%arg0: i32) -> i32 {
    %c0_i32 = arith.constant 0 : i32
    %c0_i32_0 = arith.constant 0 : i32
    return %c0_i32 : i32
  }
  func.func @transform_5(%arg0: i32) -> (i32, i32) {
    %c0_i32 = arith.constant 0 : i32
    %c0_i32_0 = arith.constant 0 : i32
    return %c0_i32, %arg0 : i32, i32
  }
}

</mosaic_0001>

<llo_original>
// kernel: tpu_custom_call.1
$region0: #{tpu_custom_call.1}
  #allocation0 [shape = 'u32[]', space=smem, size = 0x4, offset = 0x4, fixed_abs, tag = 'smem constant byte address 0x4 - core index']
  #allocation1 [shape = 'u32[144,128]{1,0:T(1,128)}', space=vmem, size = 0x12000, scoped, tag = 'internal scratch']
  #allocation2 [shape = 'f32[1]{0:T(128)S(6)}', space=smem, size = 0x200, scoped, tag = 'scoped memory for tpu_custom_call.1']
  %s0 = inlined_call_operand.hbm [shape: f32[8,784], index: 0, kind: input, shape index: {}]
  %s1 = inlined_call_operand.hbm [shape: bf16[784,256], index: 1, kind: input, shape index: {}]
  %s2 = inlined_call_operand.vmem [shape: f32[1,256], index: 2, kind: input, shape index: {}]
  %s3 = inlined_call_operand.vmem [shape: f32[1,256], index: 3, kind: input, shape index: {}]
  %s4 = inlined_call_operand.<no memory space> [shape: f32[1], index: 4, kind: input, shape index: {}]
  %s5 = inlined_call_operand.hbm [shape: f32[1,8], index: 5, kind: output, shape index: {}]
  %s6 = sld [smem:[#allocation0]]
  $region38: #{tpu_custom_call.1} parent=0
    _
  %s8 = ssub.s32 1, %s6
  %s9 = scalar_select 0, %s8, %s6
  %10 = sst [smem:[#allocation2]] %s4
  $region1: #{tpu_custom_call.1} parent=0
    #allocation3 [shape = 'u8[28672]{0}', space=vmem, size = 0x7000, scoped, tag = 'input window, operand 0, single buffered']
    #allocation4 [shape = 's32[1]{0}', space=sflag, size = 0x4, scoped, tag = 'scoped memory for tpu_custom_call.1']
    #allocation5 [shape = 's32[1]{0}', space=sflag, size = 0x4, scoped, tag = 'scoped memory for tpu_custom_call.1']
    #allocation6 [shape = 'u8[401408]{0}', space=vmem, size = 0x62000, scoped, tag = 'input window, operand 1, single buffered']
    #allocation7 [shape = 's32[1]{0}', space=sflag, size = 0x4, scoped, tag = 'scoped memory for tpu_custom_call.1']
    #allocation8 [shape = 'u8[512]{0}', space=vmem, size = 0x400, scoped, tag = 'output window, operand 0, single buffered']
    %11 = vsyncpa [#allocation4], 0
    %12 = vsyncpa [#allocation7], 0
    %13 = vsyncpa [#allocation5], 0
    // Predicated region
    $region2: #{tpu_custom_call.1} parent=1 // pred_check
      _
    $region3: #{tpu_custom_call.1} parent=1 // pred_check_branch
      %15 = sbr.rel (0) target = $region5
    $region4: #{tpu_custom_call.1} parent=1 // pred_region
      %s17 = ssub.s32 896, 896
      %18 = vsyncadd [#allocation4], %s17
      %s20 = sshll.u32 [#allocation3], 4
      %s21 = int_to_ptr.vmem [resolvable:$true] %s20
      %23 = dma.hbm_to_vmem [thread:$0]  %s0, 896, %s21, [#allocation4]
    $region5: #{tpu_custom_call.1} parent=1 // pred_fallthru
      _
    // Predicated region
    $region6: #{tpu_custom_call.1} parent=1 // pred_check
      _
    $region7: #{tpu_custom_call.1} parent=1 // pred_check_branch
      %25 = sbr.rel (0) target = $region9
    $region8: #{tpu_custom_call.1} parent=1 // pred_region
      %s27 = ssub.s32 12544, 12544
      %28 = vsyncadd [#allocation7], %s27
      %s29 = sshll.u32 [#allocation6], 4
      %s30 = int_to_ptr.vmem [resolvable:$true] %s29
      %35 = dma.hbm_to_vmem [thread:$0]  %s1, 12544, %s30, [#allocation7], 128, 128, 8
    $region9: #{tpu_custom_call.1} parent=1 // pred_fallthru
      _
    // Predicated region
    $region10: #{tpu_custom_call.1} parent=1 // pred_check
      _
    $region11: #{tpu_custom_call.1} parent=1 // pred_check_branch
      %37 = sbr.rel (0) target = $region13
    $region12: #{tpu_custom_call.1} parent=1 // pred_region
      _
    $region13: #{tpu_custom_call.1} parent=1 // pred_fallthru
      _
    // Predicated region
    $region14: #{tpu_custom_call.1} parent=1 // pred_check
      _
    $region15: #{tpu_custom_call.1} parent=1 // pred_check_branch
      %39 = sbr.rel (0) target = $region17
    $region16: #{tpu_custom_call.1} parent=1 // pred_region
      _
    $region17: #{tpu_custom_call.1} parent=1 // pred_fallthru
      _
    // Predicated region
    $region18: #{tpu_custom_call.1} parent=1 // pred_check
      _
    $region19: #{tpu_custom_call.1} parent=1 // pred_check_branch
      %41 = sbr.rel (0) target = $region21
    $region20: #{tpu_custom_call.1} parent=1 // pred_region
      _
    $region21: #{tpu_custom_call.1} parent=1 // pred_fallthru
      _
    // Predicated region
    $region22: #{tpu_custom_call.1} parent=1 // pred_check
      _
    $region23: #{tpu_custom_call.1} parent=1 // pred_check_branch
      %43 = sbr.rel (0) target = $region25
    $region24: #{tpu_custom_call.1} parent=1 // pred_region
      %44 = dma.done [#allocation4], 896
    $region25: #{tpu_custom_call.1} parent=1 // pred_fallthru
      _
    // Predicated region
    $region26: #{tpu_custom_call.1} parent=1 // pred_check
      _
    $region27: #{tpu_custom_call.1} parent=1 // pred_check_branch
      %46 = sbr.rel (0) target = $region29
    $region28: #{tpu_custom_call.1} parent=1 // pred_region
      %47 = dma.done [#allocation7], 12544
    $region29: #{tpu_custom_call.1} parent=1 // pred_fallthru
      _
    %v49 = vld [vmem:[#allocation3] sm:$0xff]
    %v50 = vld [vmem:[#allocation3 + $0x8] sm:$0xff]
    %v51 = vld [vmem:[#allocation3 + $0x10] sm:$0xff]
    %v52 = vld [vmem:[#allocation3 + $0x18] sm:$0xff]
    %v53 = vld [vmem:[#allocation3 + $0x20] sm:$0xff]
    %v54 = vld [vmem:[#allocation3 + $0x28] sm:$0xff]
    %v55 = vld [vmem:[#allocation3 + $0x30] sm:$0xff]
    %v56 = vpack.c.bf16 %v49, %v49
    %v57 = vpack.c.bf16 %v50, %v50
    %v58 = vpack.c.bf16 %v51, %v51
    %v59 = vpack.c.bf16 %v52, %v52
    %v60 = vpack.c.bf16 %v53, %v53
    %v61 = vpack.c.bf16 %v54, %v54
    %v62 = vpack.c.bf16 %v55, %v55
    %v63 = vld [vmem:[#allocation6] sm:$0xff]
    %v64 = vld [vmem:[#allocation6 + $0x8] sm:$0xff]
    %v65 = vld [vmem:[#allocation6 + $0x10] sm:$0xff]
    %v66 = vld [vmem:[#allocation6 + $0x18] sm:$0xff]
    %v67 = vld [vmem:[#allocation6 + $0x20] sm:$0xff]
    %v68 = vld [vmem:[#allocation6 + $0x28] sm:$0xff]
    %v69 = vld [vmem:[#allocation6 + $0x30] sm:$0xff]
    %v70 = vld [vmem:[#allocation6 + $0x38] sm:$0xff]
    %v71 = vld [vmem:[#allocation6 + $0x40] sm:$0xff]
    %v72 = vld [vmem:[#allocation6 + $0x48] sm:$0xff]
    %v73 = vld [vmem:[#allocation6 + $0x50] sm:$0xff]
    %v74 = vld [vmem:[#allocation6 + $0x58] sm:$0xff]
    %v75 = vld [vmem:[#allocation6 + $0x60] sm:$0xff]
    %v76 = vld [vmem:[#allocation6 + $0x68] sm:$0xff]
    %v77 = vld [vmem:[#allocation6 + $0x70] sm:$0xff]
    %v78 = vld [vmem:[#allocation6 + $0x78] sm:$0xff]
    %v79 = vld [vmem:[#allocation6 + $0x80] sm:$0xff]
    %v80 = vld [vmem:[#allocation6 + $0x88] sm:$0xff]
    %v81 = vld [vmem:[#allocation6 + $0x90] sm:$0xff]
    %v82 = vld [vmem:[#allocation6 + $0x98] sm:$0xff]
    %v83 = vld [vmem:[#allocation6 + $0xa0] sm:$0xff]
    %v84 = vld [vmem:[#allocation6 + $0xa8] sm:$0xff]
    %v85 = vld [vmem:[#allocation6 + $0xb0] sm:$0xff]
    %v86 = vld [vmem:[#allocation6 + $0xb8] sm:$0xff]
    %v87 = vld [vmem:[#allocation6 + $0xc0] sm:$0xff]
    %v88 = vld [vmem:[#allocation6 + $0xc8] sm:$0xff]
    %v89 = vld [vmem:[#allocation6 + $0xd0] sm:$0xff]
    %v90 = vld [vmem:[#allocation6 + $0xd8] sm:$0xff]
    %v91 = vld [vmem:[#allocation6 + $0xe0] sm:$0xff]
    %v92 = vld [vmem:[#allocation6 + $0xe8] sm:$0xff]
    %v93 = vld [vmem:[#allocation6 + $0xf0] sm:$0xff]
    %v94 = vld [vmem:[#allocation6 + $0xf8] sm:$0xff]
    %v95 = vld [vmem:[#allocation6 + $0x100] sm:$0xff]
    %v96 = vld [vmem:[#allocation6 + $0x108] sm:$0xff]
    %v97 = vld [vmem:[#allocation6 + $0x110] sm:$0xff]
    %v98 = vld [vmem:[#allocation6 + $0x118] sm:$0xff]
    %v99 = vld [vmem:[#allocation6 + $0x120] sm:$0xff]
    %v100 = vld [vmem:[#allocation6 + $0x128] sm:$0xff]
    %v101 = vld [vmem:[#allocation6 + $0x130] sm:$0xff]
    %v102 = vld [vmem:[#allocation6 + $0x138] sm:$0xff]
    %v103 = vld [vmem:[#allocation6 + $0x140] sm:$0xff]
    %v104 = vld [vmem:[#allocation6 + $0x148] sm:$0xff]
    %v105 = vld [vmem:[#allocation6 + $0x150] sm:$0xff]
    %v106 = vld [vmem:[#allocation6 + $0x158] sm:$0xff]
    %v107 = vld [vmem:[#allocation6 + $0x160] sm:$0xff]
    %v108 = vld [vmem:[#allocation6 + $0x168] sm:$0xff]
    %v109 = vld [vmem:[#allocation6 + $0x170] sm:$0xff]
    %v110 = vld [vmem:[#allocation6 + $0x178] sm:$0xff]
    %v111 = vld [vmem:[#allocation6 + $0x180] sm:$0xff]
    %v112 = vld [vmem:[#allocation6 + $0x188] sm:$0xff]
    %v113 = vld [vmem:[#allocation6 + $0x190] sm:$0xff]
    %v114 = vld [vmem:[#allocation6 + $0x198] sm:$0xff]
    %v115 = vld [vmem:[#allocation6 + $0x1a0] sm:$0xff]
    %v116 = vld [vmem:[#allocation6 + $0x1a8] sm:$0xff]
    %v117 = vld [vmem:[#allocation6 + $0x1b0] sm:$0xff]
    %v118 = vld [vmem:[#allocation6 + $0x1b8] sm:$0xff]
    %v119 = vld [vmem:[#allocation6 + $0x1c0] sm:$0xff]
    %v120 = vld [vmem:[#allocation6 + $0x1c8] sm:$0xff]
    %v121 = vld [vmem:[#allocation6 + $0x1d0] sm:$0xff]
    %v122 = vld [vmem:[#allocation6 + $0x1d8] sm:$0xff]
    %v123 = vld [vmem:[#allocation6 + $0x1e0] sm:$0xff]
    %v124 = vld [vmem:[#allocation6 + $0x1e8] sm:$0xff]
    %v125 = vld [vmem:[#allocation6 + $0x1f0] sm:$0xff]
    %v126 = vld [vmem:[#allocation6 + $0x1f8] sm:$0xff]
    %v127 = vld [vmem:[#allocation6 + $0x200] sm:$0xff]
    %v128 = vld [vmem:[#allocation6 + $0x208] sm:$0xff]
    %v129 = vld [vmem:[#allocation6 + $0x210] sm:$0xff]
    %v130 = vld [vmem:[#allocation6 + $0x218] sm:$0xff]
    %v131 = vld [vmem:[#allocation6 + $0x220] sm:$0xff]
    %v132 = vld [vmem:[#allocation6 + $0x228] sm:$0xff]
    %v133 = vld [vmem:[#allocation6 + $0x230] sm:$0xff]
    %v134 = vld [vmem:[#allocation6 + $0x238] sm:$0xff]
    %v135 = vld [vmem:[#allocation6 + $0x240] sm:$0xff]
    %v136 = vld [vmem:[#allocation6 + $0x248] sm:$0xff]
    %v137 = vld [vmem:[#allocation6 + $0x250] sm:$0xff]
    %v138 = vld [vmem:[#allocation6 + $0x258] sm:$0xff]
    %v139 = vld [vmem:[#allocation6 + $0x260] sm:$0xff]
    %v140 = vld [vmem:[#allocation6 + $0x268] sm:$0xff]
    %v141 = vld [vmem:[#allocation6 + $0x270] sm:$0xff]
    %v142 = vld [vmem:[#allocation6 + $0x278] sm:$0xff]
    %v143 = vld [vmem:[#allocation6 + $0x280] sm:$0xff]
    %v144 = vld [vmem:[#allocation6 + $0x288] sm:$0xff]
    %v145 = vld [vmem:[#allocation6 + $0x290] sm:$0xff]
    %v146 = vld [vmem:[#allocation6 + $0x298] sm:$0xff]
    %v147 = vld [vmem:[#allocation6 + $0x2a0] sm:$0xff]
    %v148 = vld [vmem:[#allocation6 + $0x2a8] sm:$0xff]
    %v149 = vld [vmem:[#allocation6 + $0x2b0] sm:$0xff]
    %v150 = vld [vmem:[#allocation6 + $0x2b8] sm:$0xff]
    %v151 = vld [vmem:[#allocation6 + $0x2c0] sm:$0xff]
    %v152 = vld [vmem:[#allocation6 + $0x2c8] sm:$0xff]
    %v153 = vld [vmem:[#allocation6 + $0x2d0] sm:$0xff]
    %v154 = vld [vmem:[#allocation6 + $0x2d8] sm:$0xff]
    %v155 = vld [vmem:[#allocation6 + $0x2e0] sm:$0xff]
    %v156 = vld [vmem:[#allocation6 + $0x2e8] sm:$0xff]
    %v157 = vld [vmem:[#allocation6 + $0x2f0] sm:$0xff]
    %v158 = vld [vmem:[#allocation6 + $0x2f8] sm:$0xff]
    %v159 = vld [vmem:[#allocation6 + $0x300] sm:$0xff]
    %v160 = vld [vmem:[#allocation6 + $0x308] sm:$0xff]
    %v161 = vld [vmem:[%s2] sm:$0x3]
    %v163 = vlaneseq
    %v164 = vshrl.u32 %v163, 7
    %v165 = vsub.s32 0, %v164
    %v166 = vrot.slane %v161, %v165
    %v167 = vlaneseq
    %v168 = vshrl.u32 %v167, 7
    %v169 = vsub.s32 1, %v168
    %v170 = vrot.slane %v161, %v169
    %v271 = vunpack.c.l.b16 %v63
    %v272 = vunpack.c.h.b16 %v63
    %v273 = vunpack.c.l.b16 %v64
    %v274 = vunpack.c.h.b16 %v64
    %v275 = vunpack.c.l.b16 %v65
    %v276 = vunpack.c.h.b16 %v65
    %v277 = vunpack.c.l.b16 %v66
    %v278 = vunpack.c.h.b16 %v66
    %v279 = vunpack.c.l.b16 %v67
    %v280 = vunpack.c.h.b16 %v67
    %v281 = vunpack.c.l.b16 %v68
    %v282 = vunpack.c.h.b16 %v68
    %v283 = vunpack.c.l.b16 %v69
    %v284 = vunpack.c.h.b16 %v69
    %v285 = vunpack.c.l.b16 %v70
    %v286 = vunpack.c.h.b16 %v70
    %v287 = vunpack.c.l.b16 %v71
    %v288 = vunpack.c.h.b16 %v71
    %v289 = vunpack.c.l.b16 %v72
    %v290 = vunpack.c.h.b16 %v72
    %v291 = vunpack.c.l.b16 %v73
    %v292 = vunpack.c.h.b16 %v73
    %v293 = vunpack.c.l.b16 %v74
    %v294 = vunpack.c.h.b16 %v74
    %v295 = vunpack.c.l.b16 %v75
    %v296 = vunpack.c.h.b16 %v75
    %v297 = vunpack.c.l.b16 %v76
    %v298 = vunpack.c.h.b16 %v76
    %v299 = vunpack.c.l.b16 %v77
    %v300 = vunpack.c.h.b16 %v77
    %v301 = vunpack.c.l.b16 %v78
    %v302 = vunpack.c.h.b16 %v78
    %v303 = vunpack.c.l.b16 %v79
    %v304 = vunpack.c.h.b16 %v79
    %v305 = vunpack.c.l.b16 %v80
    %v306 = vunpack.c.h.b16 %v80
    %v307 = vunpack.c.l.b16 %v81
    %v308 = vunpack.c.h.b16 %v81
    %v309 = vunpack.c.l.b16 %v82
    %v310 = vunpack.c.h.b16 %v82
    %v311 = vunpack.c.l.b16 %v83
    %v312 = vunpack.c.h.b16 %v83
    %v313 = vunpack.c.l.b16 %v84
    %v314 = vunpack.c.h.b16 %v84
    %v315 = vunpack.c.l.b16 %v85
    %v316 = vunpack.c.h.b16 %v85
    %v317 = vunpack.c.l.b16 %v86
    %v318 = vunpack.c.h.b16 %v86
    %v319 = vunpack.c.l.b16 %v87
    %v320 = vunpack.c.h.b16 %v87
    %v321 = vunpack.c.l.b16 %v88
    %v322 = vunpack.c.h.b16 %v88
    %v323 = vunpack.c.l.b16 %v89
    %v324 = vunpack.c.h.b16 %v89
    %v325 = vunpack.c.l.b16 %v90
    %v326 = vunpack.c.h.b16 %v90
    %v327 = vunpack.c.l.b16 %v91
    %v328 = vunpack.c.h.b16 %v91
    %v329 = vunpack.c.l.b16 %v92
    %v330 = vunpack.c.h.b16 %v92
    %v331 = vunpack.c.l.b16 %v93
    %v332 = vunpack.c.h.b16 %v93
    %v333 = vunpack.c.l.b16 %v94
    %v334 = vunpack.c.h.b16 %v94
    %v335 = vunpack.c.l.b16 %v95
    %v336 = vunpack.c.h.b16 %v95
    %v337 = vunpack.c.l.b16 %v96
    %v338 = vunpack.c.h.b16 %v96
    %v339 = vunpack.c.l.b16 %v97
    %v340 = vunpack.c.h.b16 %v97
    %v341 = vunpack.c.l.b16 %v98
    %v342 = vunpack.c.h.b16 %v98
    %v343 = vunpack.c.l.b16 %v99
    %v344 = vunpack.c.h.b16 %v99
    %v345 = vunpack.c.l.b16 %v100
    %v346 = vunpack.c.h.b16 %v100
    %v347 = vunpack.c.l.b16 %v101
    %v348 = vunpack.c.h.b16 %v101
    %v349 = vunpack.c.l.b16 %v102
    %v350 = vunpack.c.h.b16 %v102
    %v351 = vunpack.c.l.b16 %v103
    %v352 = vunpack.c.h.b16 %v103
    %v353 = vunpack.c.l.b16 %v104
    %v354 = vunpack.c.h.b16 %v104
    %v355 = vunpack.c.l.b16 %v105
    %v356 = vunpack.c.h.b16 %v105
    %v357 = vunpack.c.l.b16 %v106
    %v358 = vunpack.c.h.b16 %v106
    %v359 = vunpack.c.l.b16 %v107
    %v360 = vunpack.c.h.b16 %v107
    %v361 = vunpack.c.l.b16 %v108
    %v362 = vunpack.c.h.b16 %v108
    %v363 = vunpack.c.l.b16 %v109
    %v364 = vunpack.c.h.b16 %v109
    %v365 = vunpack.c.l.b16 %v110
    %v366 = vunpack.c.h.b16 %v110
    %v367 = vunpack.c.l.b16 %v111
    %v368 = vunpack.c.h.b16 %v111
    %v369 = vunpack.c.l.b16 %v112
    %v370 = vunpack.c.h.b16 %v112
    %v371 = vunpack.c.l.b16 %v113
    %v372 = vunpack.c.h.b16 %v113
    %v373 = vunpack.c.l.b16 %v114
    %v374 = vunpack.c.h.b16 %v114
    %v375 = vunpack.c.l.b16 %v115
    %v376 = vunpack.c.h.b16 %v115
    %v377 = vunpack.c.l.b16 %v116
    %v378 = vunpack.c.h.b16 %v116
    %v379 = vunpack.c.l.b16 %v117
    %v380 = vunpack.c.h.b16 %v117
    %v381 = vunpack.c.l.b16 %v118
    %v382 = vunpack.c.h.b16 %v118
    %v383 = vunpack.c.l.b16 %v119
    %v384 = vunpack.c.h.b16 %v119
    %v385 = vunpack.c.l.b16 %v120
    %v386 = vunpack.c.h.b16 %v120
    %v387 = vunpack.c.l.b16 %v121
    %v388 = vunpack.c.h.b16 %v121
    %v389 = vunpack.c.l.b16 %v122
    %v390 = vunpack.c.h.b16 %v122
    %v391 = vunpack.c.l.b16 %v123
    %v392 = vunpack.c.h.b16 %v123
    %v393 = vunpack.c.l.b16 %v124
    %v394 = vunpack.c.h.b16 %v124
    %v395 = vunpack.c.l.b16 %v125
    %v396 = vunpack.c.h.b16 %v125
    %v397 = vunpack.c.l.b16 %v126
    %v398 = vunpack.c.h.b16 %v126
    %v399 = vunpack.c.l.b16 %v127
    %v400 = vunpack.c.h.b16 %v127
    %v401 = vunpack.c.l.b16 %v128
    %v402 = vunpack.c.h.b16 %v128
    %v403 = vunpack.c.l.b16 %v129
    %v404 = vunpack.c.h.b16 %v129
    %v405 = vunpack.c.l.b16 %v130
    %v406 = vunpack.c.h.b16 %v130
    %v407 = vunpack.c.l.b16 %v131
    %v408 = vunpack.c.h.b16 %v131
    %v409 = vunpack.c.l.b16 %v132
    %v410 = vunpack.c.h.b16 %v132
    %v411 = vunpack.c.l.b16 %v133
    %v412 = vunpack.c.h.b16 %v133
    %v413 = vunpack.c.l.b16 %v134
    %v414 = vunpack.c.h.b16 %v134
    %v415 = vunpack.c.l.b16 %v135
    %v416 = vunpack.c.h.b16 %v135
    %v417 = vunpack.c.l.b16 %v136
    %v418 = vunpack.c.h.b16 %v136
    %v419 = vunpack.c.l.b16 %v137
    %v420 = vunpack.c.h.b16 %v137
    %v421 = vunpack.c.l.b16 %v138
    %v422 = vunpack.c.h.b16 %v138
    %v423 = vunpack.c.l.b16 %v139
    %v424 = vunpack.c.h.b16 %v139
    %v425 = vunpack.c.l.b16 %v140
    %v426 = vunpack.c.h.b16 %v140
    %v427 = vunpack.c.l.b16 %v141
    %v428 = vunpack.c.h.b16 %v141
    %v429 = vunpack.c.l.b16 %v142
    %v430 = vunpack.c.h.b16 %v142
    %v431 = vunpack.c.l.b16 %v143
    %v432 = vunpack.c.h.b16 %v143
    %v433 = vunpack.c.l.b16 %v144
    %v434 = vunpack.c.h.b16 %v144
    %v435 = vunpack.c.l.b16 %v145
    %v436 = vunpack.c.h.b16 %v145
    %v437 = vunpack.c.l.b16 %v146
    %v438 = vunpack.c.h.b16 %v146
    %v439 = vunpack.c.l.b16 %v147
    %v440 = vunpack.c.h.b16 %v147
    %v441 = vunpack.c.l.b16 %v148
    %v442 = vunpack.c.h.b16 %v148
    %v443 = vunpack.c.l.b16 %v149
    %v444 = vunpack.c.h.b16 %v149
    %v445 = vunpack.c.l.b16 %v150
    %v446 = vunpack.c.h.b16 %v150
    %v447 = vunpack.c.l.b16 %v151
    %v448 = vunpack.c.h.b16 %v151
    %v449 = vunpack.c.l.b16 %v152
    %v450 = vunpack.c.h.b16 %v152
    %v451 = vunpack.c.l.b16 %v153
    %v452 = vunpack.c.h.b16 %v153
    %v453 = vunpack.c.l.b16 %v154
    %v454 = vunpack.c.h.b16 %v154
    %v455 = vunpack.c.l.b16 %v155
    %v456 = vunpack.c.h.b16 %v155
    %v457 = vunpack.c.l.b16 %v156
    %v458 = vunpack.c.h.b16 %v156
    %v459 = vunpack.c.l.b16 %v157
    %v460 = vunpack.c.h.b16 %v157
    %v461 = vunpack.c.l.b16 %v158
    %v462 = vunpack.c.h.b16 %v158
    %v463 = vunpack.c.l.b16 %v159
    %v464 = vunpack.c.h.b16 %v159
    %v465 = vunpack.c.l.b16 %v160
    %v466 = vunpack.c.h.b16 %v160
    %v467 = vpack.c.b16 %v273, %v271
    %v468 = vpack.c.b16 %v274, %v272
    %v469 = vpack.c.b16 %v277, %v275
    %v470 = vpack.c.b16 %v278, %v276
    %v471 = vpack.c.b16 %v281, %v279
    %v472 = vpack.c.b16 %v282, %v280
    %v473 = vpack.c.b16 %v285, %v283
    %v474 = vpack.c.b16 %v286, %v284
    %v475 = vpack.c.b16 %v289, %v287
    %v476 = vpack.c.b16 %v290, %v288
    %v477 = vpack.c.b16 %v293, %v291
    %v478 = vpack.c.b16 %v294, %v292
    %v479 = vpack.c.b16 %v297, %v295
    %v480 = vpack.c.b16 %v298, %v296
    %v481 = vpack.c.b16 %v301, %v299
    %v482 = vpack.c.b16 %v302, %v300
    %v483 = vpack.c.b16 %v305, %v303
    %v484 = vpack.c.b16 %v306, %v304
    %v485 = vpack.c.b16 %v309, %v307
    %v486 = vpack.c.b16 %v310, %v308
    %v487 = vpack.c.b16 %v313, %v311
    %v488 = vpack.c.b16 %v314, %v312
    %v489 = vpack.c.b16 %v317, %v315
    %v490 = vpack.c.b16 %v318, %v316
    %v491 = vpack.c.b16 %v321, %v319
    %v492 = vpack.c.b16 %v322, %v320
    %v493 = vpack.c.b16 %v325, %v323
    %v494 = vpack.c.b16 %v326, %v324
    %v495 = vpack.c.b16 %v329, %v327
    %v496 = vpack.c.b16 %v330, %v328
    %v497 = vpack.c.b16 %v333, %v331
    %v498 = vpack.c.b16 %v334, %v332
    %v499 = vpack.c.b16 %v337, %v335
    %v500 = vpack.c.b16 %v338, %v336
    %v501 = vpack.c.b16 %v341, %v339
    %v502 = vpack.c.b16 %v342, %v340
    %v503 = vpack.c.b16 %v345, %v343
    %v504 = vpack.c.b16 %v346, %v344
    %v505 = vpack.c.b16 %v349, %v347
    %v506 = vpack.c.b16 %v350, %v348
    %v507 = vpack.c.b16 %v353, %v351
    %v508 = vpack.c.b16 %v354, %v352
    %v509 = vpack.c.b16 %v357, %v355
    %v510 = vpack.c.b16 %v358, %v356
    %v511 = vpack.c.b16 %v361, %v359
    %v512 = vpack.c.b16 %v362, %v360
    %v513 = vpack.c.b16 %v365, %v363
    %v514 = vpack.c.b16 %v366, %v364
    %v515 = vpack.c.b16 %v369, %v367
    %v516 = vpack.c.b16 %v370, %v368
    %v517 = vpack.c.b16 %v373, %v371
    %v518 = vpack.c.b16 %v374, %v372
    %v519 = vpack.c.b16 %v377, %v375
    %v520 = vpack.c.b16 %v378, %v376
    %v521 = vpack.c.b16 %v381, %v379
    %v522 = vpack.c.b16 %v382, %v380
    %v523 = vpack.c.b16 %v385, %v383
    %v524 = vpack.c.b16 %v386, %v384
    %v525 = vpack.c.b16 %v389, %v387
    %v526 = vpack.c.b16 %v390, %v388
    %v527 = vpack.c.b16 %v393, %v391
    %v528 = vpack.c.b16 %v394, %v392
    %v529 = vpack.c.b16 %v397, %v395
    %v530 = vpack.c.b16 %v398, %v396
    %v531 = vpack.c.b16 %v401, %v399
    %v532 = vpack.c.b16 %v402, %v400
    %v533 = vpack.c.b16 %v405, %v403
    %v534 = vpack.c.b16 %v406, %v404
    %v535 = vpack.c.b16 %v409, %v407
    %v536 = vpack.c.b16 %v410, %v408
    %v537 = vpack.c.b16 %v413, %v411
    %v538 = vpack.c.b16 %v414, %v412
    %v539 = vpack.c.b16 %v417, %v415
    %v540 = vpack.c.b16 %v418, %v416
    %v541 = vpack.c.b16 %v421, %v419
    %v542 = vpack.c.b16 %v422, %v420
    %v543 = vpack.c.b16 %v425, %v423
    %v544 = vpack.c.b16 %v426, %v424
    %v545 = vpack.c.b16 %v429, %v427
    %v546 = vpack.c.b16 %v430, %v428
    %v547 = vpack.c.b16 %v433, %v431
    %v548 = vpack.c.b16 %v434, %v432
    %v549 = vpack.c.b16 %v437, %v435
    %v550 = vpack.c.b16 %v438, %v436
    %v551 = vpack.c.b16 %v441, %v439
    %v552 = vpack.c.b16 %v442, %v440
    %v553 = vpack.c.b16 %v445, %v443
    %v554 = vpack.c.b16 %v446, %v444
    %v555 = vpack.c.b16 %v449, %v447
    %v556 = vpack.c.b16 %v450, %v448
    %v557 = vpack.c.b16 %v453, %v451
    %v558 = vpack.c.b16 %v454, %v452
    %v559 = vpack.c.b16 %v457, %v455
    %v560 = vpack.c.b16 %v458, %v456
    %v561 = vpack.c.b16 %v461, %v459
    %v562 = vpack.c.b16 %v462, %v460
    %v563 = vpack.c.b16 %v465, %v463
    %v564 = vpack.c.b16 %v466, %v464
    %vm663 = vcmask 130048
    %v665 = vsel %vm663, %v62, 0
    %667 = vmatprep.subr.bf16.mxu0 %v468
    %668 = vmatpush1.bf16.msra.mxu0 %v467
    %669 = vmatprep.subr.bf16.mxu0 %v470
    %670 = vmatpush1.bf16.msra.mxu0 %v469
    %671 = vmatprep.subr.bf16.mxu0 %v472
    %672 = vmatpush1.bf16.msra.mxu0 %v471
    %673 = vmatprep.subr.bf16.mxu0 %v474
    %674 = vmatpush1.bf16.msra.mxu0 %v473
    %675 = vmatprep.subr.bf16.mxu0 %v476
    %676 = vmatpush1.bf16.msra.mxu0 %v475
    %677 = vmatprep.subr.bf16.mxu0 %v478
    %678 = vmatpush1.bf16.msra.mxu0 %v477
    %679 = vmatprep.subr.bf16.mxu0 %v480
    %680 = vmatpush1.bf16.msra.mxu0 %v479
    %681 = vmatprep.subr.bf16.mxu0 %v482
    %682 = vmatpush1.bf16.msra.mxu0 %v481
    %683 = vmatprep.subr.bf16.mxu0 %v484
    %684 = vmatpush1.bf16.msra.mxu0 %v483
    %685 = vmatprep.subr.bf16.mxu0 %v486
    %686 = vmatpush1.bf16.msra.mxu0 %v485
    %687 = vmatprep.subr.bf16.mxu0 %v488
    %688 = vmatpush1.bf16.msra.mxu0 %v487
    %689 = vmatprep.subr.bf16.mxu0 %v490
    %690 = vmatpush1.bf16.msra.mxu0 %v489
    %691 = vmatprep.subr.bf16.mxu0 %v492
    %692 = vmatpush1.bf16.msra.mxu0 %v491
    %693 = vmatprep.subr.bf16.mxu0 %v494
    %694 = vmatpush1.bf16.msra.mxu0 %v493
    %695 = vmatprep.subr.bf16.mxu0 %v496
    %696 = vmatpush1.bf16.msra.mxu0 %v495
    %697 = vmatprep.subr.bf16.mxu0 %v498
    %698 = vmatpush1.bf16.msra.mxu0 %v497
    %699 = vmatprep.mubr.bf16.mxu0 %v57
    %700 = vmatmul.mubr.bf16.gmra.mrb[0].mxu0 %v56
    %v701 = vpop.f32.mrb[0].mxu0
    %v702 = vadd.f32 %v166, %v701
    %v703 = vpop.f32.mrb[0].mxu0
    %v704 = vadd.f32 %v170, %v703
    %v705 = vpop.f32.mrb[0].mxu0
    %v706 = vpop.f32.mrb[0].mxu0
    %707 = vdwg.mxu0
    %708 = vmatprep.subr.bf16.mxu0 %v500
    %709 = vmatpush1.bf16.msra.mxu0 %v499
    %710 = vmatprep.subr.bf16.mxu0 %v502
    %711 = vmatpush1.bf16.msra.mxu0 %v501
    %712 = vmatprep.subr.bf16.mxu0 %v504
    %713 = vmatpush1.bf16.msra.mxu0 %v503
    %714 = vmatprep.subr.bf16.mxu0 %v506
    %715 = vmatpush1.bf16.msra.mxu0 %v505
    %716 = vmatprep.subr.bf16.mxu0 %v508
    %717 = vmatpush1.bf16.msra.mxu0 %v507
    %718 = vmatprep.subr.bf16.mxu0 %v510
    %719 = vmatpush1.bf16.msra.mxu0 %v509
    %720 = vmatprep.subr.bf16.mxu0 %v512
    %721 = vmatpush1.bf16.msra.mxu0 %v511
    %722 = vmatprep.subr.bf16.mxu0 %v514
    %723 = vmatpush1.bf16.msra.mxu0 %v513
    %724 = vmatprep.subr.bf16.mxu0 %v516
    %725 = vmatpush1.bf16.msra.mxu0 %v515
    %726 = vmatprep.subr.bf16.mxu0 %v518
    %727 = vmatpush1.bf16.msra.mxu0 %v517
    %728 = vmatprep.subr.bf16.mxu0 %v520
    %729 = vmatpush1.bf16.msra.mxu0 %v519
    %730 = vmatprep.subr.bf16.mxu0 %v522
    %731 = vmatpush1.bf16.msra.mxu0 %v521
    %732 = vmatprep.subr.bf16.mxu0 %v524
    %733 = vmatpush1.bf16.msra.mxu0 %v523
    %734 = vmatprep.subr.bf16.mxu0 %v526
    %735 = vmatpush1.bf16.msra.mxu0 %v525
    %736 = vmatprep.subr.bf16.mxu0 %v528
    %737 = vmatpush1.bf16.msra.mxu0 %v527
    %738 = vmatprep.subr.bf16.mxu0 %v530
    %739 = vmatpush1.bf16.msra.mxu0 %v529
    %740 = vmatprep.mubr.bf16.mxu0 %v59
    %741 = vmatmul.mubr.bf16.gmra.mrb[0].mxu0 %v58
    %v742 = vpop.f32.mrb[0].mxu0
    %v743 = vadd.f32 %v702, %v742
    %v744 = vpop.f32.mrb[0].mxu0
    %v745 = vadd.f32 %v704, %v744
    %v746 = vpop.f32.mrb[0].mxu0
    %v747 = vpop.f32.mrb[0].mxu0
    %748 = vdwg.mxu0
    %749 = vmatprep.subr.bf16.mxu0 %v532
    %750 = vmatpush1.bf16.msra.mxu0 %v531
    %751 = vmatprep.subr.bf16.mxu0 %v534
    %752 = vmatpush1.bf16.msra.mxu0 %v533
    %753 = vmatprep.subr.bf16.mxu0 %v536
    %754 = vmatpush1.bf16.msra.mxu0 %v535
    %755 = vmatprep.subr.bf16.mxu0 %v538
    %756 = vmatpush1.bf16.msra.mxu0 %v537
    %757 = vmatprep.subr.bf16.mxu0 %v540
    %758 = vmatpush1.bf16.msra.mxu0 %v539
    %759 = vmatprep.subr.bf16.mxu0 %v542
    %760 = vmatpush1.bf16.msra.mxu0 %v541
    %761 = vmatprep.subr.bf16.mxu0 %v544
    %762 = vmatpush1.bf16.msra.mxu0 %v543
    %763 = vmatprep.subr.bf16.mxu0 %v546
    %764 = vmatpush1.bf16.msra.mxu0 %v545
    %765 = vmatprep.subr.bf16.mxu0 %v548
    %766 = vmatpush1.bf16.msra.mxu0 %v547
    %767 = vmatprep.subr.bf16.mxu0 %v550
    %768 = vmatpush1.bf16.msra.mxu0 %v549
    %769 = vmatprep.subr.bf16.mxu0 %v552
    %770 = vmatpush1.bf16.msra.mxu0 %v551
    %771 = vmatprep.subr.bf16.mxu0 %v554
    %772 = vmatpush1.bf16.msra.mxu0 %v553
    %773 = vmatprep.subr.bf16.mxu0 %v556
    %774 = vmatpush1.bf16.msra.mxu0 %v555
    %775 = vmatprep.subr.bf16.mxu0 %v558
    %776 = vmatpush1.bf16.msra.mxu0 %v557
    %777 = vmatprep.subr.bf16.mxu0 %v560
    %778 = vmatpush1.bf16.msra.mxu0 %v559
    %779 = vmatprep.subr.bf16.mxu0 %v562
    %780 = vmatpush1.bf16.msra.mxu0 %v561
    %781 = vmatprep.mubr.bf16.mxu0 %v61
    %782 = vmatmul.mubr.bf16.gmra.mrb[0].mxu0 %v60
    %v783 = vpop.f32.mrb[0].mxu0
    %v784 = vadd.f32 %v743, %v783
    %v785 = vpop.f32.mrb[0].mxu0
    %v786 = vadd.f32 %v745, %v785
    %v787 = vpop.f32.mrb[0].mxu0
    %v788 = vpop.f32.mrb[0].mxu0
    %789 = vdwg.mxu0
    %790 = vmatprep.subr.bf16.mxu0 %v564
    %791 = vmatpush1.bf16.msra.mxu0 %v563
    %792 = vmatprep.subr.bf16.mxu0 0
    %793 = vmatpush1.bf16.msra.mxu0 0
    %794 = vmatprep.subr.bf16.mxu0 0
    %795 = vmatpush1.bf16.msra.mxu0 0
    %796 = vmatprep.subr.bf16.mxu0 0
    %797 = vmatpush1.bf16.msra.mxu0 0
    %798 = vmatprep.subr.bf16.mxu0 0
    %799 = vmatpush1.bf16.msra.mxu0 0
    %800 = vmatprep.subr.bf16.mxu0 0
    %801 = vmatpush1.bf16.msra.mxu0 0
    %802 = vmatprep.subr.bf16.mxu0 0
    %803 = vmatpush1.bf16.msra.mxu0 0
    %804 = vmatprep.subr.bf16.mxu0 0
    %805 = vmatpush1.bf16.msra.mxu0 0
    %806 = vmatprep.subr.bf16.mxu0 0
    %807 = vmatpush1.bf16.msra.mxu0 0
    %808 = vmatprep.subr.bf16.mxu0 0
    %809 = vmatpush1.bf16.msra.mxu0 0
    %810 = vmatprep.subr.bf16.mxu0 0
    %811 = vmatpush1.bf16.msra.mxu0 0
    %812 = vmatprep.subr.bf16.mxu0 0
    %813 = vmatpush1.bf16.msra.mxu0 0
    %814 = vmatprep.subr.bf16.mxu0 0
    %815 = vmatpush1.bf16.msra.mxu0 0
    %816 = vmatprep.subr.bf16.mxu0 0
    %817 = vmatpush1.bf16.msra.mxu0 0
    %818 = vmatprep.subr.bf16.mxu0 0
    %819 = vmatpush1.bf16.msra.mxu0 0
    %820 = vmatprep.subr.bf16.mxu0 0
    %821 = vmatpush1.bf16.msra.mxu0 0
    %822 = vmatprep.mubr.bf16.mxu0 0
    %823 = vmatmul.mubr.bf16.gmra.mrb[0].mxu0 %v665
    %v824 = vpop.f32.mrb[0].mxu0
    %v825 = vadd.f32 %v784, %v824
    %v826 = vpop.f32.mrb[0].mxu0
    %v827 = vadd.f32 %v786, %v826
    %v828 = vpop.f32.mrb[0].mxu0
    %v829 = vpop.f32.mrb[0].mxu0
    %830 = vdwg.mxu0
    %v831 = vmul.f32 %v825, 0.4
    %v832 = vmul.f32 %v827, 0.4
    %v833 = vmax.f32 %v825, %v831
    %v834 = vmax.f32 %v827, %v832
    %v835 = vld [vmem:[%s3] sm:$0x3]
    %v837 = vlaneseq
    %v838 = vshrl.u32 %v837, 7
    %v839 = vsub.s32 0, %v838
    %v840 = vrot.slane %v835, %v839
    %v841 = vlaneseq
    %v842 = vshrl.u32 %v841, 7
    %v843 = vsub.s32 1, %v842
    %v844 = vrot.slane %v835, %v843
    %v847 = vmul.f32 %v833, %v840
    %v848 = vmul.f32 %v834, %v844
    %v849 = vadd.f32 %v847, %v848
    %850 = vadd.xlane.f32.xlu0 %v849
    %v851 = vpop.xlane.xlu0 %850
    %s852 = sld [smem:[#allocation2]]
    %v853 = vstv %s852
    %v854 = vadd.f32 %v851, %v853
    %v855 = vxor.u32 %v854, 2147483648
    %v856 = vmul.f32 %v855, 1.442695
    %v857 = vpow.pop %v856
    %v858 = vadd.f32 %v857, 1.0
    %v859 = vrcp.pop %v858
    %v860 = vmul.f32 1.0, %v859
    %v862 = vlaneseq
    %v863 = vand.u32 %v862, 127
    %v864 = vlaneseq
    %v865 = vshrl.u32 %v864, 7
    %v866 = vsub.s32 %v863, %v865
    %v867 = vrot.slane %v860, %v866
    %vm869 = vcmask 57344
    %870 = vst.msk [vmem:[#allocation8] sm:$0x1] %vm869, %v867
    // Predicated region
    $region30: #{tpu_custom_call.1} parent=1 // pred_check
      _
    $region31: #{tpu_custom_call.1} parent=1 // pred_check_branch
      %872 = sbr.rel (0) target = $region33
    $region32: #{tpu_custom_call.1} parent=1 // pred_region
      %s874 = ssub.s32 16, 16
      %875 = vsyncadd [#allocation5], %s874
      %s877 = sshll.u32 [#allocation8], 4
      %s878 = int_to_ptr.vmem [resolvable:$true] %s877
      %880 = dma.vmem_to_hbm [thread:$0]  %s878, 16, %s5, [#allocation5]
    $region33: #{tpu_custom_call.1} parent=1 // pred_fallthru
      _
    // Predicated region
    $region34: #{tpu_custom_call.1} parent=1 // pred_check
      _
    $region35: #{tpu_custom_call.1} parent=1 // pred_check_branch
      %882 = sbr.rel (0) target = $region37
    $region36: #{tpu_custom_call.1} parent=1 // pred_region
      %883 = dma.done [#allocation5], 16
    $region37: #{tpu_custom_call.1} parent=1 // pred_fallthru
      _
    %884 = vsyncpa [#allocation4], 1
    %885 = vsyncpa [#allocation7], 1
    %886 = vsyncpa [#allocation5], 1

</llo_original>
